<compile_context>
chip_gen: v6e
topology: v6e:2x2x1
jax: 0.10.0
libtpu: 0.0.40
codegen_flags: <defaults>
</compile_context>

<pallas_src>
import functools

import jax
import jax.numpy as jnp
from jax.experimental import pallas as pl
from jax.experimental.pallas import tpu as pltpu


def _round_up(x, m):
    return ((x + m - 1) // m) * m


@functools.lru_cache(maxsize=None)
def _vmem_budget_bytes():
    """Generation-specific VMEM budget (~3/4 of physical VMEM)."""
    try:
        cap = int(pltpu.get_tpu_info().vmem_capacity_bytes)
    except Exception:
        cap = 64 * 1024 * 1024  # conservative fallback (v7x-sized)
    return (cap * 3) // 4


def _pick_tile_p(hw, c, pred_itemsize, vmem_budget):
    """Largest lane-aligned pixel tile that fits the VMEM budget."""
    # Per-pixel bytes: double-buffered pred + targets, resident f32 loss/count rows,
    # plus ~6 f32 (C, tile_p)-shaped intermediates the compiler materializes in VMEM.
    per_pixel = 2 * c * pred_itemsize + 2 * 4 + 2 * 2 * 4 + 6 * c * 4
    tile = (vmem_budget // per_pixel) // 128 * 128
    tile = min(tile, _round_up(hw, 128), 256 * 1024)
    return max(128, tile)


def _ce_partial_kernel(pred_ref, tgt_ref, loss_ref, cnt_ref, *,
                       hw, tile_p, tiles_per_split):
    """Per-(split, batch, pixel-tile) cross-entropy partials, pixel-on-lane layout.

    pred_ref: (1, C, TP) logits (class on sublanes, pixel on lanes; any float dtype)
    tgt_ref:  (1, 1, TP) int32 targets (negative => ignored, e.g. -100)
    loss_ref: (1, 1, 1, TP) f32 per-lane partial loss sums (resident over the tile axis)
    cnt_ref:  (1, 1, 1, TP) f32 per-lane valid-pixel counts (resident over the tile axis)
    """
    s = pl.program_id(0)
    t = pl.program_id(2)

    # Output blocks are resident across the pixel-tile (reduction) axis: zero at t == 0.
    @pl.when(t == 0)
    def _():
        loss_ref[...] = jnp.zeros_like(loss_ref)
        cnt_ref[...] = jnp.zeros_like(cnt_ref)

    # True pixel index of each lane; masks both the partial final tile and nothing else.
    tile_idx = s * tiles_per_split + t
    p0 = tile_idx * tile_p
    lane = jax.lax.broadcasted_iota(jnp.int32, (1, tile_p), dimension=1)
    in_bounds = (p0 + lane) < hw                                  # (1, TP) bool

    logits = pred_ref[0].astype(jnp.float32)                     # (C, TP)
    # Clamp out-of-range lanes BEFORE exp so garbage from a partial block can't make NaN.
    logits = jnp.where(in_bounds, logits, 0.0)

    tgt = tgt_ref[0]                                             # (1, TP) int32
    # nn.CrossEntropyLoss ignore_index: negative targets (-100) excluded from num & denom.
    valid = in_bounds & (tgt >= 0)                               # (1, TP) bool

    # Numerically stable log-sum-exp over the class (sublane) axis.
    m = jnp.max(logits, axis=0, keepdims=True)                   # (1, TP)
    lse = m + jnp.log(jnp.sum(jnp.exp(logits - m), axis=0, keepdims=True))

    # Target-class logit via VPU compare+select (small C: no MXU one-hot matmul).
    class_ids = jax.lax.broadcasted_iota(jnp.int32, logits.shape, dimension=0)
    tgt_logit = jnp.sum(jnp.where(class_ids == tgt, logits, 0.0),
                        axis=0, keepdims=True)                   # (1, TP)

    valid_f = valid.astype(jnp.float32)
    # Lane-dense elementwise accumulate (pure VPU add, full-width unmasked store).
    loss_ref[...] += ((lse - tgt_logit) * valid_f)[None, None]
    cnt_ref[...] += valid_f[None, None]


@functools.partial(jax.jit, static_argnames=("vmem_budget",))
def _ce_loss_mean(pred_nchw, target_nhw, vmem_budget):
    N, C, H, W = pred_nchw.shape
    HW = H * W

    # Native-layout reshape only: (N, C, H, W) -> (N, C, H*W).  No transpose, no pad.
    pred = pred_nchw.reshape(N, C, HW)
    tgt = target_nhw.astype(jnp.int32).reshape(N, 1, HW)

    tile_p = _pick_tile_p(HW, C, pred.dtype.itemsize, vmem_budget)
    num_tiles = (HW + tile_p - 1) // tile_p

    # Optional leading split axis so both v7x TensorCores participate when the
    # batch axis alone can't be sharded evenly (harmless size-1 axis otherwise).
    n_split = 2 if (N % 2 == 1 and num_tiles >= 2 and num_tiles % 2 == 0) else 1
    tiles_per_split = num_tiles // n_split

    kernel = functools.partial(_ce_partial_kernel, hw=HW, tile_p=tile_p,
                               tiles_per_split=tiles_per_split)

    loss_part, cnt_part = pl.pallas_call(
        kernel,
        out_shape=(
            jax.ShapeDtypeStruct((n_split, N, 1, tile_p), jnp.float32),
            jax.ShapeDtypeStruct((n_split, N, 1, tile_p), jnp.float32),
        ),
        grid_spec=pltpu.PrefetchScalarGridSpec(
            num_scalar_prefetch=0,
            grid=(n_split, N, tiles_per_split),
            in_specs=[
                pl.BlockSpec((1, C, tile_p),
                             lambda s, n, t: (n, 0, s * tiles_per_split + t)),
                pl.BlockSpec((1, 1, tile_p),
                             lambda s, n, t: (n, 0, s * tiles_per_split + t)),
            ],
            out_specs=[
                pl.BlockSpec((1, 1, 1, tile_p), lambda s, n, t: (s, n, 0, 0)),
                pl.BlockSpec((1, 1, 1, tile_p), lambda s, n, t: (s, n, 0, 0)),
            ],
        ),
        compiler_params=pltpu.CompilerParams(
            # split & batch axes shard across TensorCores; pixel-tile axis is the
            # sequential reduction.
            dimension_semantics=("parallel", "parallel", "arbitrary"),
            # Generation-specific scoped-VMEM budget (48 MiB v7x, 96 MiB v5e/v6e).
            vmem_limit_bytes=int(vmem_budget),
        ),
    )(pred, tgt)

    # Tiny final reduction over partial rows; mean over non-ignored pixels only,
    # matching nn.CrossEntropyLoss(ignore_index=-100, reduction='mean').
    total = jnp.sum(loss_part)
    count = jnp.sum(cnt_part)
    return total / count


def segmentation_loss(segmentation_pred, segmentation_target):
    """Mirror of SegmentationLoss.forward.

    segmentation_pred:   (N, C, H, W) float logits (NCHW, like PyTorch; f32 or bf16)
    segmentation_target: (N, H, W)    int class indices (-100 => ignored)
    Returns (loss, {'segmentation_loss': loss}).  The dict carries the traced device
    scalar; call .item()/float() only when logging (avoids a device->host sync on the
    hot path, unlike PyTorch's loss.item()).
    """
    loss = _ce_loss_mean(segmentation_pred, segmentation_target, _vmem_budget_bytes())
    return loss, {"segmentation_loss": loss}


def _reference_ce(pred, tgt):
    """Plain-JAX nn.CrossEntropyLoss reference (mean over non-ignored targets)."""
    N, C, H, W = pred.shape
    logits = jnp.transpose(pred, (0, 2, 3, 1)).reshape(-1, C)
    t = tgt.reshape(-1)
    valid = (t >= 0).astype(jnp.float32)
    safe_t = jnp.where(t >= 0, t, 0)
    logp = jax.nn.log_softmax(logits, axis=-1)
    per = logp[jnp.arange(t.shape[0]), safe_t]
    return -(jnp.sum(per * valid) / jnp.sum(valid))


if __name__ == "__main__":
    key = jax.random.PRNGKey(0)
    k_pred, k_tgt, k_mask = jax.random.split(key, 3)

    # Test 1: tile-aligned pixel count, all targets valid.
    N, C, H, W = 2, 4, 16, 16
    segmentation_pred = jax.random.normal(k_pred, (N, C, H, W), dtype=jnp.float32)
    segmentation_target = jax.random.randint(k_tgt, (N, H, W), 0, C, dtype=jnp.int32)

    loss, metrics = segmentation_loss(segmentation_pred, segmentation_target)
    jax.block_until_ready(loss)

    ref = _reference_ce(segmentation_pred, segmentation_target)
    assert jnp.allclose(loss, ref, rtol=1e-5, atol=1e-5), (loss, ref)
    assert abs(float(metrics["segmentation_loss"]) - float(ref)) < 1e-5

    # Test 2: non-tile-multiple pixel count -> exercises the in-kernel mask path
    # (partial boundary block, no jnp.pad of the logits).
    H2, W2 = 10, 13
    pred2 = jax.random.normal(k_pred, (N, C, H2, W2), dtype=jnp.float32)
    tgt2 = jax.random.randint(k_tgt, (N, H2, W2), 0, C, dtype=jnp.int32)
    loss2, _ = segmentation_loss(pred2, tgt2)
    ref2 = _reference_ce(pred2, tgt2)
    assert jnp.allclose(loss2, ref2, rtol=1e-5, atol=1e-5), (loss2, ref2)

    # Test 3: ignore_index=-100 semantics (ignored pixels excluded from num & denom).
    drop = jax.random.bernoulli(k_mask, 0.2, (N, H, W))
    tgt3 = jnp.where(drop, jnp.int32(-100), segmentation_target)
    loss3, _ = segmentation_loss(segmentation_pred, tgt3)
    ref3 = _reference_ce(segmentation_pred, tgt3)
    assert jnp.allclose(loss3, ref3, rtol=1e-5, atol=1e-5), (loss3, ref3)

    print("KERNEL_OK")
</pallas_src>

<mosaic_0001>
module attributes {stable_mosaic.version = 11 : i64} {
  func.func @_ce_partial_kernel(%arg0: i32, %arg1: i32, %arg2: i32, %arg3: memref<1x4x256xf32, #tpu.memory_space<vmem>>, %arg4: memref<1x1x256xi32, #tpu.memory_space<vmem>>, %arg5: memref<1x1x1x256xf32, #tpu.memory_space<vmem>>, %arg6: memref<1x1x1x256xf32, #tpu.memory_space<vmem>>) attributes {dimension_semantics = [#tpu.dimension_semantics<parallel>, #tpu.dimension_semantics<parallel>, #tpu.dimension_semantics<arbitrary>], iteration_bounds = array<i64: 1, 2, 1>, scalar_prefetch = 0 : i64, scratch_operands = 0 : i64, tpu.core_type = #tpu.core_type<tc>, window_params = [{transform_indices = @transform_0, window_bounds = array<i64: 1, 4, 256>}, {transform_indices = @transform_1, window_bounds = array<i64: 1, 1, 256>}, {transform_indices = @transform_2, window_bounds = array<i64: 1, 1, 1, 256>}, {transform_indices = @transform_3, window_bounds = array<i64: 1, 1, 1, 256>}]} {
    %c0_i32 = arith.constant 0 : i32
    %0 = arith.cmpi eq, %arg2, %c0_i32 : i32
    %1 = arith.extui %0 : i1 to i32
    %c0_i32_0 = arith.constant 0 : i32
    %2 = arith.cmpi ne, %1, %c0_i32_0 : i32
    scf.if %2 {
      %cst_28 = arith.constant 0.000000e+00 : f32
      %50 = vector.broadcast %cst_28 : f32 to vector<1x1x1x256xf32>
      %c0_29 = arith.constant 0 : index
      %c0_30 = arith.constant 0 : index
      %c0_31 = arith.constant 0 : index
      %c0_32 = arith.constant 0 : index
      %51 = vector.load %arg5[%c0_29, %c0_30, %c0_31, %c0_32] : memref<1x1x1x256xf32, #tpu.memory_space<vmem>>, vector<1x1x1x256xf32>
      tpu.vector_store %arg5[%c0_29, %c0_30, %c0_31, %c0_32], %50 {strides = array<i32>} : memref<1x1x1x256xf32, #tpu.memory_space<vmem>>, vector<1x1x1x256xf32>,
      %cst_33 = arith.constant 0.000000e+00 : f32
      %52 = vector.broadcast %cst_33 : f32 to vector<1x1x1x256xf32>
      %c0_34 = arith.constant 0 : index
      %c0_35 = arith.constant 0 : index
      %c0_36 = arith.constant 0 : index
      %c0_37 = arith.constant 0 : index
      %53 = vector.load %arg6[%c0_34, %c0_35, %c0_36, %c0_37] : memref<1x1x1x256xf32, #tpu.memory_space<vmem>>, vector<1x1x1x256xf32>
      tpu.vector_store %arg6[%c0_34, %c0_35, %c0_36, %c0_37], %52 {strides = array<i32>} : memref<1x1x1x256xf32, #tpu.memory_space<vmem>>, vector<1x1x1x256xf32>,
    } else {
    }
    %c1_i32 = arith.constant 1 : i32
    %3 = arith.muli %arg0, %c1_i32 : i32
    %4 = arith.addi %3, %arg2 : i32
    %c256_i32 = arith.constant 256 : i32
    %5 = arith.muli %4, %c256_i32 : i32
    %6 = tpu.iota {dimensions = array<i32: 1>} : vector<1x256xi32>
    %7 = vector.broadcast %5 : i32 to vector<1x256xi32>
    %8 = arith.addi %7, %6 : vector<1x256xi32>
    %c256_i32_1 = arith.constant 256 : i32
    %9 = vector.broadcast %c256_i32_1 : i32 to vector<1x256xi32>
    %10 = arith.cmpi slt, %8, %9 : vector<1x256xi32>
    %c0 = arith.constant 0 : index
    %c0_2 = arith.constant 0 : index
    %c0_3 = arith.constant 0 : index
    %11 = vector.load %arg3[%c0, %c0_2, %c0_3] : memref<1x4x256xf32, #tpu.memory_space<vmem>>, vector<1x4x256xf32>
    %12 = vector.shape_cast %11 : vector<1x4x256xf32> to vector<4x256xf32>
    %cst = arith.constant 0.000000e+00 : f32
    %13 = vector.shape_cast %10 : vector<1x256xi1> to vector<1x256xi1>
    %14 = vector.broadcast %13 : vector<1x256xi1> to vector<4x256xi1>
    %15 = vector.broadcast %cst : f32 to vector<4x256xf32>
    %16 = arith.select %14, %12, %15 : vector<4x256xi1>, vector<4x256xf32>
    %c0_4 = arith.constant 0 : index
    %c0_5 = arith.constant 0 : index
    %c0_6 = arith.constant 0 : index
    %17 = vector.load %arg4[%c0_4, %c0_5, %c0_6] : memref<1x1x256xi32, #tpu.memory_space<vmem>>, vector<1x1x256xi32>
    %18 = vector.shape_cast %17 : vector<1x1x256xi32> to vector<1x256xi32>
    %c0_i32_7 = arith.constant 0 : i32
    %19 = vector.broadcast %c0_i32_7 : i32 to vector<1x256xi32>
    %20 = arith.cmpi sge, %18, %19 : vector<1x256xi32>
    %21 = arith.andi %10, %20 : vector<1x256xi1>
    %cst_8 = arith.constant dense<0xFF800000> : vector<256xf32>
    %22 = vector.multi_reduction <maximumf>, %16, %cst_8 [0] : vector<4x256xf32> to vector<256xf32>
    %23 = vector.shape_cast %22 : vector<256xf32> to vector<1x256xf32>
    %24 = vector.broadcast %23 : vector<1x256xf32> to vector<4x256xf32>
    %25 = arith.subf %16, %24 : vector<4x256xf32>
    %26 = math.exp %25 : vector<4x256xf32>
    %cst_9 = arith.constant dense<0.000000e+00> : vector<256xf32>
    %27 = vector.multi_reduction <add>, %26, %cst_9 [0] : vector<4x256xf32> to vector<256xf32>
    %28 = vector.shape_cast %27 : vector<256xf32> to vector<1x256xf32>
    %29 = math.log %28 : vector<1x256xf32>
    %30 = arith.addf %23, %29 : vector<1x256xf32>
    %31 = tpu.iota {dimensions = array<i32: 0>} : vector<4x256xi32>
    %32 = vector.broadcast %18 : vector<1x256xi32> to vector<4x256xi32>
    %33 = arith.cmpi eq, %31, %32 : vector<4x256xi32>
    %cst_10 = arith.constant 0.000000e+00 : f32
    %34 = vector.broadcast %cst_10 : f32 to vector<4x256xf32>
    %35 = arith.select %33, %16, %34 : vector<4x256xi1>, vector<4x256xf32>
    %cst_11 = arith.constant dense<0.000000e+00> : vector<256xf32>
    %36 = vector.multi_reduction <add>, %35, %cst_11 [0] : vector<4x256xf32> to vector<256xf32>
    %37 = vector.shape_cast %36 : vector<256xf32> to vector<1x256xf32>
    %38 = arith.extui %21 : vector<1x256xi1> to vector<1x256xi32>
    %39 = arith.sitofp %38 : vector<1x256xi32> to vector<1x256xf32>
    %c0_12 = arith.constant 0 : index
    %c0_13 = arith.constant 0 : index
    %c0_14 = arith.constant 0 : index
    %c0_15 = arith.constant 0 : index
    %40 = vector.load %arg5[%c0_12, %c0_13, %c0_14, %c0_15] : memref<1x1x1x256xf32, #tpu.memory_space<vmem>>, vector<1x1x1x256xf32>
    %41 = arith.subf %30, %37 : vector<1x256xf32>
    %42 = arith.mulf %41, %39 : vector<1x256xf32>
    %43 = vector.shape_cast %42 : vector<1x256xf32> to vector<1x1x1x256xf32>
    %44 = arith.addf %40, %43 : vector<1x1x1x256xf32>
    %c0_16 = arith.constant 0 : index
    %c0_17 = arith.constant 0 : index
    %c0_18 = arith.constant 0 : index
    %c0_19 = arith.constant 0 : index
    %45 = vector.load %arg5[%c0_16, %c0_17, %c0_18, %c0_19] : memref<1x1x1x256xf32, #tpu.memory_space<vmem>>, vector<1x1x1x256xf32>
    tpu.vector_store %arg5[%c0_16, %c0_17, %c0_18, %c0_19], %44 {strides = array<i32>} : memref<1x1x1x256xf32, #tpu.memory_space<vmem>>, vector<1x1x1x256xf32>,
    %c0_20 = arith.constant 0 : index
    %c0_21 = arith.constant 0 : index
    %c0_22 = arith.constant 0 : index
    %c0_23 = arith.constant 0 : index
    %46 = vector.load %arg6[%c0_20, %c0_21, %c0_22, %c0_23] : memref<1x1x1x256xf32, #tpu.memory_space<vmem>>, vector<1x1x1x256xf32>
    %47 = vector.shape_cast %39 : vector<1x256xf32> to vector<1x1x1x256xf32>
    %48 = arith.addf %46, %47 : vector<1x1x1x256xf32>
    %c0_24 = arith.constant 0 : index
    %c0_25 = arith.constant 0 : index
    %c0_26 = arith.constant 0 : index
    %c0_27 = arith.constant 0 : index
    %49 = vector.load %arg6[%c0_24, %c0_25, %c0_26, %c0_27] : memref<1x1x1x256xf32, #tpu.memory_space<vmem>>, vector<1x1x1x256xf32>
    tpu.vector_store %arg6[%c0_24, %c0_25, %c0_26, %c0_27], %48 {strides = array<i32>} : memref<1x1x1x256xf32, #tpu.memory_space<vmem>>, vector<1x1x1x256xf32>,
    return
  }
  func.func @transform_0(%arg0: i32, %arg1: i32, %arg2: i32) -> (i32, i32, i32) {
    %c1_i32 = arith.constant 1 : i32
    %0 = arith.muli %arg0, %c1_i32 : i32
    %1 = arith.addi %0, %arg2 : i32
    %c0_i32 = arith.constant 0 : i32
    %c0_i32_0 = arith.constant 0 : i32
    return %arg1, %c0_i32, %1 : i32, i32, i32
  }
  func.func @transform_1(%arg0: i32, %arg1: i32, %arg2: i32) -> (i32, i32, i32) {
    %c1_i32 = arith.constant 1 : i32
    %0 = arith.muli %arg0, %c1_i32 : i32
    %1 = arith.addi %0, %arg2 : i32
    %c0_i32 = arith.constant 0 : i32
    %c0_i32_0 = arith.constant 0 : i32
    return %arg1, %c0_i32, %1 : i32, i32, i32
  }
  func.func @transform_2(%arg0: i32, %arg1: i32, %arg2: i32) -> (i32, i32, i32, i32) {
    %c0_i32 = arith.constant 0 : i32
    %c0_i32_0 = arith.constant 0 : i32
    %c0_i32_1 = arith.constant 0 : i32
    return %arg0, %arg1, %c0_i32, %c0_i32_0 : i32, i32, i32, i32
  }
  func.func @transform_3(%arg0: i32, %arg1: i32, %arg2: i32) -> (i32, i32, i32, i32) {
    %c0_i32 = arith.constant 0 : i32
    %c0_i32_0 = arith.constant 0 : i32
    %c0_i32_1 = arith.constant 0 : i32
    return %arg0, %arg1, %c0_i32, %c0_i32_0 : i32, i32, i32, i32
  }
}

</mosaic_0001>

<llo_original>
// kernel: _ce_loss_mean.1
$region0: #{_ce_loss_mean.1}
  #allocation0 [shape = 'u32[]', space=smem, size = 0x4, offset = 0x4, fixed_abs, tag = 'smem constant byte address 0x4 - core index']
  #allocation1 [shape = 'u32[144,128]{1,0:T(1,128)}', space=vmem, size = 0x12000, scoped, tag = 'internal scratch']
  %s0 = inlined_call_operand.vmem [shape: f32[2,4,256], index: 0, kind: input, shape index: {}]
  %s1 = inlined_call_operand.vmem [shape: s32[2,1,256], index: 1, kind: input, shape index: {}]
  %s2 = inlined_call_operand.vmem [shape: f32[1,2,1,256], index: 2, kind: output, shape index: {0}]
  %s3 = inlined_call_operand.vmem [shape: f32[1,2,1,256], index: 3, kind: output, shape index: {1}]
  %4 = xla_tuple %s2, %s3
  %s5 = sld [smem:[#allocation0]]
  $region53: #{_ce_loss_mean.1} parent=0
    _
  %s7 = ssub.s32 1, %s5
  %s8 = scalar_select 0, %s7, %s5
  loop: start=0, step=1, limit=4
  $region2: #{_ce_loss_mean.1} parent=0 // loop_pre_header
    _
  $region3: #{_ce_loss_mean.1} parent=0 // loop_header
    %s10 = sphi 0, %s14
    %p11 = scmp.ge.s32.totalorder %s10, 4
    %s17 = sphi 0, %s36
    %s18 = sphi 0, %s32
    %s19 = sphi 0, %s28
    %s20 = sphi 0, %s17
    %s21 = sphi 0, %s18
    %s22 = sphi 0, %s19
    %s23 = sphi 0, %s20
    %s24 = sphi 0, %s21
    %s25 = sphi 0, %s22
    %s43 = sphi 0, %s45
    %s46 = sphi 0, %s43
    %s47 = sphi 0, %s46
    %s63 = sphi 0, %s47
    %s73 = sphi 0, %s75
    %s76 = sphi 0, %s73
    %s77 = sphi 0, %s76
    %s93 = sphi 0, %s77
    %s101 = sphi 0, %s103
    %s104 = sphi 0, %s101
    %s105 = sphi 0, %s104
    %s121 = sphi 0, %s105
    %s129 = sphi 0, %s131
    %s132 = sphi 0, %s129
    %s133 = sphi 0, %s132
    %s149 = sphi 0, %s133
  $region4: #{_ce_loss_mean.1} parent=0 // loop_header_branch
    %13 = sbr.rel (%p11) target = $region8
  $region5: #{_ce_loss_mean.1} parent=0 // loop_body
    %s15 = ssub.s32 %s10, 1
    %s16 = ssub.s32 %s10, 2
    %s26 = sadd.s32 1, %s19
    %p27 = scmp.ge.s32.totalorder %s26, 1
    %s28 = scalar_select %p27, 0, %s26
    %s29 = sadd.s32 1, %s18
    %s30 = scalar_select %p27, %s29, %s18
    %p31 = scmp.ge.s32.totalorder %s30, 2
    %s32 = scalar_select %p31, 0, %s30
    %s33 = sadd.s32 1, %s17
    %s34 = scalar_select %p31, %s33, %s17
    %p35 = scmp.ge.s32.totalorder %s34, 1
    %s36 = scalar_select %p35, 0, %s34
    %s37 = sadd.s32 %s17, %s19
    %s38 = sadd.s32 %s36, %s28
    %s39 = ssub.s32 %s18, %s32
    %s40 = ssub.s32 %s37, %s38
    %s41 = sor.u32 %s39, %s40
    %p42 = scmp.eq.s32.totalorder %s41, 0
    %s44 = sadd.s32 %s43, 1
    %s45 = scalar_select %p42, %s43, %s44
    %p48 = pneg %p42
    %p49 = scmp.eq.s32.totalorder %s10, 1
    %p50 = por %p48, %p49
    %p51 = scmp.ne.s32.totalorder %s43, %s46
    %p52 = scmp.eq.s32.totalorder %s10, 0
    %p53 = por %p51, %p52
    %p54 = scmp.ne.s32.totalorder %s43, %s46
    %p55 = scmp.eq.s32.totalorder %s15, 1
    %p56 = por %p54, %p55
    %p57 = scmp.ne.s32.totalorder %s46, %s47
    %p58 = scmp.eq.s32.totalorder %s15, 0
    %p59 = por %p57, %p58
    %p60 = scmp.ne.s32.totalorder %s46, %s47
    %p61 = scmp.eq.s32.totalorder %s16, 1
    %p62 = por %p60, %p61
    %p64 = scmp.ne.s32.totalorder %s47, %s63
    %p65 = scmp.eq.s32.totalorder %s16, 0
    %p66 = por %p64, %p65
    %s67 = sadd.s32 %s17, %s19
    %s68 = sadd.s32 %s36, %s28
    %s69 = ssub.s32 %s18, %s32
    %s70 = ssub.s32 %s67, %s68
    %s71 = sor.u32 %s69, %s70
    %p72 = scmp.eq.s32.totalorder %s71, 0
    %s74 = sadd.s32 %s73, 1
    %s75 = scalar_select %p72, %s73, %s74
    %p78 = pneg %p72
    %p79 = scmp.eq.s32.totalorder %s10, 1
    %p80 = por %p78, %p79
    %p81 = scmp.ne.s32.totalorder %s73, %s76
    %p82 = scmp.eq.s32.totalorder %s10, 0
    %p83 = por %p81, %p82
    %p84 = scmp.ne.s32.totalorder %s73, %s76
    %p85 = scmp.eq.s32.totalorder %s15, 1
    %p86 = por %p84, %p85
    %p87 = scmp.ne.s32.totalorder %s76, %s77
    %p88 = scmp.eq.s32.totalorder %s15, 0
    %p89 = por %p87, %p88
    %p90 = scmp.ne.s32.totalorder %s76, %s77
    %p91 = scmp.eq.s32.totalorder %s16, 1
    %p92 = por %p90, %p91
    %p94 = scmp.ne.s32.totalorder %s77, %s93
    %p95 = scmp.eq.s32.totalorder %s16, 0
    %p96 = por %p94, %p95
    %s97 = ssub.s32 %s17, %s36
    %s98 = ssub.s32 %s18, %s32
    %s99 = sor.u32 %s97, %s98
    %p100 = scmp.eq.s32.totalorder %s99, 0
    %s102 = sadd.s32 %s101, 1
    %s103 = scalar_select %p100, %s101, %s102
    %p106 = pneg %p100
    %p107 = scmp.eq.s32.totalorder %s10, 1
    %p108 = por %p106, %p107
    %p109 = scmp.ne.s32.totalorder %s101, %s104
    %p110 = scmp.eq.s32.totalorder %s10, 0
    %p111 = por %p109, %p110
    %p112 = scmp.ne.s32.totalorder %s101, %s104
    %p113 = scmp.eq.s32.totalorder %s15, 1
    %p114 = por %p112, %p113
    %p115 = scmp.ne.s32.totalorder %s104, %s105
    %p116 = scmp.eq.s32.totalorder %s15, 0
    %p117 = por %p115, %p116
    %p118 = scmp.ne.s32.totalorder %s104, %s105
    %p119 = scmp.eq.s32.totalorder %s16, 1
    %p120 = por %p118, %p119
    %p122 = scmp.ne.s32.totalorder %s105, %s121
    %p123 = scmp.eq.s32.totalorder %s16, 0
    %p124 = por %p122, %p123
    %s125 = ssub.s32 %s17, %s36
    %s126 = ssub.s32 %s18, %s32
    %s127 = sor.u32 %s125, %s126
    %p128 = scmp.eq.s32.totalorder %s127, 0
    %s130 = sadd.s32 %s129, 1
    %s131 = scalar_select %p128, %s129, %s130
    %p134 = pneg %p128
    %p135 = scmp.eq.s32.totalorder %s10, 1
    %p136 = por %p134, %p135
    %p137 = scmp.ne.s32.totalorder %s129, %s132
    %p138 = scmp.eq.s32.totalorder %s10, 0
    %p139 = por %p137, %p138
    %p140 = scmp.ne.s32.totalorder %s129, %s132
    %p141 = scmp.eq.s32.totalorder %s15, 1
    %p142 = por %p140, %p141
    %p143 = scmp.ne.s32.totalorder %s132, %s133
    %p144 = scmp.eq.s32.totalorder %s15, 0
    %p145 = por %p143, %p144
    %p146 = scmp.ne.s32.totalorder %s132, %s133
    %p147 = scmp.eq.s32.totalorder %s16, 1
    %p148 = por %p146, %p147
    %p150 = scmp.ne.s32.totalorder %s133, %s149
    %p151 = scmp.eq.s32.totalorder %s16, 0
    %p152 = por %p150, %p151
    %p153 = scmp.le.s32.totalorder 1, %s10
    %p154 = scmp.lt.s32.totalorder %s10, 3
    %p155 = pnand %p153, %p154
    %p156 = pneg %p155
    // Predicated region
    $region9: #{_ce_loss_mean.1} parent=5 // pred_check
      _
    $region10: #{_ce_loss_mean.1} parent=5 // pred_check_branch
      %158 = sbr.rel (%p155) target = $region12
    $region11: #{_ce_loss_mean.1} parent=5 // pred_region
      %s159 = ssub.s32 %s10, 1
    $region12: #{_ce_loss_mean.1} parent=5 // pred_fallthru
      _
    %p160 = scmp.lt.s32.totalorder %s10, 2
    // Predicated region
    $region13: #{_ce_loss_mean.1} parent=5 // pred_check
      %p161 = pneg %p160
    $region14: #{_ce_loss_mean.1} parent=5 // pred_check_branch
      %163 = sbr.rel (%p161) target = $region16
    $region15: #{_ce_loss_mean.1} parent=5 // pred_region
      // Predicated region
      $region17: #{_ce_loss_mean.1} parent=15 // pred_check
        %p164 = pneg %p53
      $region18: #{_ce_loss_mean.1} parent=15 // pred_check_branch
        %166 = sbr.rel (%p164) target = $region20
      $region19: #{_ce_loss_mean.1} parent=15 // pred_region
        %s167 = sadd.s32 %s17, %s19
        %s168 = smul.u32 2, %s167
        %p169 = scmp.lt.s32.totalorder %s18, 1
        %s170 = scalar_select %p169, %s18, 1
        %p171 = scmp.lt.s32.totalorder %s168, 1
        %s172 = scalar_select %p171, %s168, 1
        %s173 = smul.addr %s170, 2
        %s174 = sadd.s32 %s172, %s173
        %s175 = smul.addr %s174, 4
        %s176 = scalar_lea.vmem %s0, %s175
        %s177 = sadd.s32 %s17, %s19
        %s178 = smul.u32 2, %s177
      $region20: #{_ce_loss_mean.1} parent=15 // pred_fallthru
        _
      // Predicated region
      $region21: #{_ce_loss_mean.1} parent=15 // pred_check
        %p179 = pneg %p83
      $region22: #{_ce_loss_mean.1} parent=15 // pred_check_branch
        %181 = sbr.rel (%p179) target = $region24
      $region23: #{_ce_loss_mean.1} parent=15 // pred_region
        %s182 = sadd.s32 %s17, %s19
        %s183 = smul.u32 2, %s182
        %p184 = scmp.lt.s32.totalorder %s18, 1
        %s185 = scalar_select %p184, %s18, 1
        %p186 = scmp.lt.s32.totalorder %s183, 1
        %s187 = scalar_select %p186, %s183, 1
        %s188 = smul.addr %s185, 2
        %s189 = sadd.s32 %s187, %s188
        %s190 = scalar_lea.vmem %s1, %s189
        %s191 = sadd.s32 %s17, %s19
        %s192 = smul.u32 2, %s191
      $region24: #{_ce_loss_mean.1} parent=15 // pred_fallthru
        _
    $region16: #{_ce_loss_mean.1} parent=5 // pred_fallthru
      _
    %p193 = scmp.le.s32.totalorder 1, %s10
    %p194 = scmp.lt.s32.totalorder %s10, 3
    %p195 = pnand %p193, %p194
    %p196 = pneg %p195
    // Predicated region
    $region25: #{_ce_loss_mean.1} parent=5 // pred_check
      _
    $region26: #{_ce_loss_mean.1} parent=5 // pred_check_branch
      %198 = sbr.rel (%p195) target = $region28
    $region27: #{_ce_loss_mean.1} parent=5 // pred_region
      %s199 = ssub.s32 %s10, 1
      %s200 = sadd.s32 %s20, %s22
      %s201 = smul.u32 2, %s200
      %p202 = scmp.lt.s32.totalorder %s21, 1
      %s203 = scalar_select %p202, %s21, 1
      %p204 = scmp.lt.s32.totalorder %s201, 1
      %s205 = scalar_select %p204, %s201, 1
      %s206 = smul.addr %s203, 2
      %s207 = sadd.s32 %s205, %s206
      %s208 = smul.addr %s207, 4
      %s209 = scalar_lea.vmem %s0, %s208
      %p210 = pneg %p59
      %p211 = pneg %p56
      %s212 = sadd.s32 %s20, %s22
      %s213 = smul.u32 2, %s212
      %p214 = scmp.lt.s32.totalorder %s21, 1
      %s215 = scalar_select %p214, %s21, 1
      %p216 = scmp.lt.s32.totalorder %s213, 1
      %s217 = scalar_select %p216, %s213, 1
      %s218 = smul.addr %s215, 2
      %s219 = sadd.s32 %s217, %s218
      %s220 = scalar_lea.vmem %s1, %s219
      %p221 = pneg %p89
      %p222 = pneg %p86
      %p223 = pneg %p117
      %p224 = pneg %p114
      %p225 = scmp.lt.s32.totalorder %s20, 0
      %s226 = scalar_select %p225, %s20, 0
      %p227 = scmp.lt.s32.totalorder %s21, 1
      %s228 = scalar_select %p227, %s21, 1
      %s229 = smul.addr %s228, 2
      %s230 = smul.addr %s226, 4
      %s231 = sadd.s32 %s229, %s230
      %s232 = scalar_lea.vmem %s2, %s231
      %p233 = pneg %p145
      %p234 = pneg %p142
      %p235 = scmp.lt.s32.totalorder %s20, 0
      %s236 = scalar_select %p235, %s20, 0
      %p237 = scmp.lt.s32.totalorder %s21, 1
      %s238 = scalar_select %p237, %s21, 1
      %s239 = smul.addr %s238, 2
      %s240 = smul.addr %s236, 4
      %s241 = sadd.s32 %s239, %s240
      %s242 = scalar_lea.vmem %s3, %s241
      %s243 = sadd.s32 %s20, %s22
      %s244 = smul.u32 2, %s243
      %p245 = scmp.lt.s32.totalorder %s21, 1
      %s246 = scalar_select %p245, %s21, 1
      %p247 = scmp.lt.s32.totalorder %s244, 1
      %s248 = scalar_select %p247, %s244, 1
      %s249 = smul.addr %s246, 2
      %s250 = sadd.s32 %s248, %s249
      %s251 = smul.addr %s250, 4
      %s252 = scalar_lea.vmem %s0, %s251
      %s253 = sadd.s32 %s20, %s22
      %s254 = smul.u32 2, %s253
      %s255 = sadd.s32 %s20, %s22
      %s256 = smul.u32 2, %s255
      %p257 = scmp.lt.s32.totalorder %s21, 1
      %s258 = scalar_select %p257, %s21, 1
      %p259 = scmp.lt.s32.totalorder %s256, 1
      %s260 = scalar_select %p259, %s256, 1
      %s261 = smul.addr %s258, 2
      %s262 = sadd.s32 %s260, %s261
      %s263 = scalar_lea.vmem %s1, %s262
      %s264 = sadd.s32 %s20, %s22
      %s265 = smul.u32 2, %s264
      %p266 = scmp.lt.s32.totalorder %s20, 0
      %s267 = scalar_select %p266, %s20, 0
      %p268 = scmp.lt.s32.totalorder %s21, 1
      %s269 = scalar_select %p268, %s21, 1
      %s270 = smul.addr %s269, 2
      %s271 = smul.addr %s267, 4
      %s272 = sadd.s32 %s270, %s271
      %s273 = scalar_lea.vmem %s2, %s272
      %p274 = scmp.lt.s32.totalorder %s20, 0
      %s275 = scalar_select %p274, %s20, 0
      %p276 = scmp.lt.s32.totalorder %s21, 1
      %s277 = scalar_select %p276, %s21, 1
      %s278 = smul.addr %s277, 2
      %s279 = smul.addr %s275, 4
      %s280 = sadd.s32 %s278, %s279
      %s281 = scalar_lea.vmem %s3, %s280
      %p282 = scmp.eq.s32.totalorder %s22, 0
      // Predicated region
      $region29: #{_ce_loss_mean.1} parent=27 // pred_check
        %p283 = pneg %p282
      $region30: #{_ce_loss_mean.1} parent=27 // pred_check_branch
        %285 = sbr.rel (%p283) target = $region32
      $region31: #{_ce_loss_mean.1} parent=27 // pred_region
        %v286 = vlaneseq
        %vm287 = vcmp.ge.s32.totalorder %v286, 0
        %vm288 = vcmp.lt.s32.totalorder %v286, 256
        %vm289 = vmand %vm287, %vm288
        %290 = vst.msk [vmem:[%s273] sm:$0x3] %vm289, 0.0
        %291 = vst.msk [vmem:[%s281] sm:$0x3] %vm289, 0.0
      $region32: #{_ce_loss_mean.1} parent=27 // pred_fallthru
        _
      %s292 = sadd.s32 %s20, %s22
      %s293 = smul.u32 %s292, 256
      %v294 = vlaneseq
      %v295 = vand.u32 %v294, 127
      %v296 = vadd.s32 %v295, 128
      %v297 = vstv %s293
      %v298 = vadd.s32 %v297, %v295
      %v299 = vadd.s32 %v297, %v296
      %vm300 = vcmp.lt.s32.totalorder %v298, 256
      %vm301 = vcmp.lt.s32.totalorder %v299, 256
      %v302 = vld [vmem:[%s252] sm:$0xff]
      %v303 = vsel %vm300, 1, 0
      %v304 = vsel %vm301, 1, 0
      %vm305 = vcmp.eq.s32.totalorder %v303, 1
      %vm306 = vcmp.eq.s32.totalorder %v304, 1
      %v308 = vcombine.high %v302, %v302
      %v310 = vsel %vm305, %v302, 0.0
      %v311 = vsel %vm306, %v308, 0.0
      %v312 = vld [vmem:[%s263] sm:$0x3]
      %vm313 = vcmp.ge.s32.totalorder %v312, 0
      %v314 = vsel %vm313, 1, 0
      %v315 = vlaneseq
      %v316 = vshrl.u32 %v315, 7
      %v317 = vsub.s32 0, %v316
      %v318 = vrot.slane %v314, %v317
      %v319 = vlaneseq
      %v320 = vshrl.u32 %v319, 7
      %v321 = vsub.s32 1, %v320
      %v322 = vrot.slane %v314, %v321
      %vm323 = vcmp.ne.s32.totalorder %v318, 0
      %vm324 = vcmp.ne.s32.totalorder %v322, 0
      %vm325 = vmand %vm300, %vm323
      %vm326 = vmand %vm301, %vm324
      %vm327 = vcmask 1043456
      %v328 = vsel %vm327, %v310, -inf
      %v329 = vrot.slane %v328, 4
      %v330 = vmax.f32 %v328, %v329
      %v331 = vrot.slane %v330, 2
      %v332 = vmax.f32 %v330, %v331
      %v333 = vrot.slane %v332, 1
      %v334 = vmax.f32 %v332, %v333
      %v335 = vsel %vm327, %v311, -inf
      %v336 = vrot.slane %v335, 4
      %v337 = vmax.f32 %v335, %v336
      %v338 = vrot.slane %v337, 2
      %v339 = vmax.f32 %v337, %v338
      %v340 = vrot.slane %v339, 1
      %v341 = vmax.f32 %v339, %v340
      %v342 = vsub.f32 %v310, %v334
      %v343 = vsub.f32 %v311, %v341
      %v344 = vmul.f32 %v342, 1.442695
      %v345 = vpow.pop %v344
      %v346 = vmul.f32 %v343, 1.442695
      %v347 = vpow.pop %v346
      %v348 = vsel %vm327, %v345, 0.0
      %v349 = vrot.slane %v348, 4
      %v350 = vadd.f32 %v348, %v349
      %v351 = vrot.slane %v350, 2
      %v352 = vadd.f32 %v350, %v351
      %v353 = vrot.slane %v352, 1
      %v354 = vadd.f32 %v352, %v353
      %v355 = vsel %vm327, %v347, 0.0
      %v356 = vrot.slane %v355, 4
      %v357 = vadd.f32 %v355, %v356
      %v358 = vrot.slane %v357, 2
      %v359 = vadd.f32 %v357, %v358
      %v360 = vrot.slane %v359, 1
      %v361 = vadd.f32 %v359, %v360
      %v362 = vlog2.pop %v354
      %v363 = vmul.f32 %v362, 0.6931472
      %v364 = vlog2.pop %v361
      %v365 = vmul.f32 %v364, 0.6931472
      %v366 = vadd.f32 %v334, %v363
      %v367 = vadd.f32 %v341, %v365
      %v368 = vlaneseq
      %v369 = vshrl.u32 %v368, 7
      %v370 = vlaneseq
      %v371 = vshrl.u32 %v370, 7
      %v372 = vsub.s32 0, %v371
      %v373 = vrot.slane %v312, %v372
      %v374 = vlaneseq
      %v375 = vshrl.u32 %v374, 7
      %v376 = vsub.s32 1, %v375
      %v377 = vrot.slane %v312, %v376
      %vm378 = vcmp.eq.s32.totalorder %v369, %v373
      %vm379 = vcmp.eq.s32.totalorder %v369, %v377
      %v380 = vsel %vm378, %v310, 0.0
      %v381 = vsel %vm379, %v311, 0.0
      %v382 = vsel %vm327, %v380, 0.0
      %v383 = vrot.slane %v382, 4
      %v384 = vadd.f32 %v382, %v383
      %v385 = vrot.slane %v384, 2
      %v386 = vadd.f32 %v384, %v385
      %v387 = vrot.slane %v386, 1
      %v388 = vadd.f32 %v386, %v387
      %v389 = vsel %vm327, %v381, 0.0
      %v390 = vrot.slane %v389, 4
      %v391 = vadd.f32 %v389, %v390
      %v392 = vrot.slane %v391, 2
      %v393 = vadd.f32 %v391, %v392
      %v394 = vrot.slane %v393, 1
      %v395 = vadd.f32 %v393, %v394
      %v396 = vsel %vm325, 1, 0
      %v397 = vsel %vm326, 1, 0
      %v398 = vcvt.s32.f32 %v396
      %v399 = vcvt.s32.f32 %v397
      %v400 = vld [vmem:[%s273] sm:$0x3]
      %v401 = vsub.f32 %v366, %v388
      %v402 = vsub.f32 %v367, %v395
      %v403 = vmul.f32 %v401, %v398
      %v404 = vmul.f32 %v402, %v399
      %v407 = vcombine.low %v403, %v404
      %v409 = vunpack.c.l.s4 1966171168
      %v410 = vunpack.c.0.s8 %v409
      %v411 = vlaneseq
      %v412 = vshrl.u32 %v411, 7
      %v413 = vsub.s32 %v410, %v412
      %v414 = vrot.slane %v407, %v413
      %v416 = vunpack.c.l.s4 1966171168
      %v417 = vunpack.c.0.s8 %v416
      %v418 = vlaneseq
      %v419 = vshrl.u32 %v418, 7
      %v420 = vsub.s32 %v417, %v419
      %v421 = vrot.slane %v414, %v420
      %v423 = vadd.f32 %v400, %v421
      %v424 = vlaneseq
      %vm425 = vcmp.ge.s32.totalorder %v424, 0
      %vm426 = vcmp.lt.s32.totalorder %v424, 256
      %vm427 = vmand %vm425, %vm426
      %428 = vst.msk [vmem:[%s273] sm:$0x3] %vm427, %v423
      %v429 = vld [vmem:[%s281] sm:$0x3]
      %v432 = vcombine.low %v398, %v399
      %v434 = vunpack.c.l.s4 1966171168
      %v435 = vunpack.c.0.s8 %v434
      %v436 = vlaneseq
      %v437 = vshrl.u32 %v436, 7
      %v438 = vsub.s32 %v435, %v437
      %v439 = vrot.slane %v432, %v438
      %v441 = vunpack.c.l.s4 1966171168
      %v442 = vunpack.c.0.s8 %v441
      %v443 = vlaneseq
      %v444 = vshrl.u32 %v443, 7
      %v445 = vsub.s32 %v442, %v444
      %v446 = vrot.slane %v439, %v445
      %v448 = vadd.f32 %v429, %v446
      %449 = vst.msk [vmem:[%s281] sm:$0x3] %vm427, %v448
      %p450 = scmp.lt.s32.totalorder %s20, 0
      %s451 = scalar_select %p450, %s20, 0
      %p452 = scmp.lt.s32.totalorder %s21, 1
      %s453 = scalar_select %p452, %s21, 1
      %s454 = smul.addr %s453, 2
      %s455 = smul.addr %s451, 4
      %s456 = sadd.s32 %s454, %s455
      %s457 = scalar_lea.vmem %s2, %s456
      %p458 = scmp.lt.s32.totalorder %s20, 0
      %s459 = scalar_select %p458, %s20, 0
      %p460 = scmp.lt.s32.totalorder %s21, 1
      %s461 = scalar_select %p460, %s21, 1
      %s462 = smul.addr %s461, 2
      %s463 = smul.addr %s459, 4
      %s464 = sadd.s32 %s462, %s463
      %s465 = scalar_lea.vmem %s3, %s464
      // Predicated region
      $region33: #{_ce_loss_mean.1} parent=27 // pred_check
        %p466 = pneg %p114
      $region34: #{_ce_loss_mean.1} parent=27 // pred_check_branch
        %468 = sbr.rel (%p466) target = $region36
      $region35: #{_ce_loss_mean.1} parent=27 // pred_region
        _
      $region36: #{_ce_loss_mean.1} parent=27 // pred_fallthru
        _
      // Predicated region
      $region37: #{_ce_loss_mean.1} parent=27 // pred_check
        %p469 = pneg %p142
      $region38: #{_ce_loss_mean.1} parent=27 // pred_check_branch
        %471 = sbr.rel (%p469) target = $region40
      $region39: #{_ce_loss_mean.1} parent=27 // pred_region
        _
      $region40: #{_ce_loss_mean.1} parent=27 // pred_fallthru
        _
    $region28: #{_ce_loss_mean.1} parent=5 // pred_fallthru
      _
    %p472 = scmp.le.s32.totalorder 2, %s10
    // Predicated region
    $region41: #{_ce_loss_mean.1} parent=5 // pred_check
      %p473 = pneg %p472
    $region42: #{_ce_loss_mean.1} parent=5 // pred_check_branch
      %475 = sbr.rel (%p473) target = $region44
    $region43: #{_ce_loss_mean.1} parent=5 // pred_region
      %s476 = ssub.s32 %s10, 2
      // Predicated region
      $region45: #{_ce_loss_mean.1} parent=43 // pred_check
        %p477 = pneg %p120
      $region46: #{_ce_loss_mean.1} parent=43 // pred_check_branch
        %479 = sbr.rel (%p477) target = $region48
      $region47: #{_ce_loss_mean.1} parent=43 // pred_region
        %p480 = scmp.lt.s32.totalorder %s23, 0
        %s481 = scalar_select %p480, %s23, 0
        %p482 = scmp.lt.s32.totalorder %s24, 1
        %s483 = scalar_select %p482, %s24, 1
        %s484 = smul.addr %s483, 2
        %s485 = smul.addr %s481, 4
        %s486 = sadd.s32 %s484, %s485
        %s487 = scalar_lea.vmem %s2, %s486
      $region48: #{_ce_loss_mean.1} parent=43 // pred_fallthru
        _
      // Predicated region
      $region49: #{_ce_loss_mean.1} parent=43 // pred_check
        %p488 = pneg %p148
      $region50: #{_ce_loss_mean.1} parent=43 // pred_check_branch
        %490 = sbr.rel (%p488) target = $region52
      $region51: #{_ce_loss_mean.1} parent=43 // pred_region
        %p491 = scmp.lt.s32.totalorder %s23, 0
        %s492 = scalar_select %p491, %s23, 0
        %p493 = scmp.lt.s32.totalorder %s24, 1
        %s494 = scalar_select %p493, %s24, 1
        %s495 = smul.addr %s494, 2
        %s496 = smul.addr %s492, 4
        %s497 = sadd.s32 %s495, %s496
        %s498 = scalar_lea.vmem %s3, %s497
      $region52: #{_ce_loss_mean.1} parent=43 // pred_fallthru
        _
    $region44: #{_ce_loss_mean.1} parent=5 // pred_fallthru
      _
  $region6: #{_ce_loss_mean.1} parent=0 // loop_footer
    %s14 = sadd.s32 1, %s10
  $region7: #{_ce_loss_mean.1} parent=0 // loop_footer_branch
    %9 = sbr.rel target = $region3
  $region8: #{_ce_loss_mean.1} parent=0 // loop_exit
    _

</llo_original>
